<compile_context>
chip_gen: v6e
topology: v6e:2x2x1
jax: 0.10.0
libtpu: 0.0.40
codegen_flags: <defaults>
</compile_context>

<pallas_src>
import functools

import jax
import jax.numpy as jnp
from jax import lax
from jax.experimental import pallas as pl
from jax.experimental.pallas import tpu as pltpu

_BN_EPS = 1e-5
_SQRT_2_OVER_PI = 0.7978845608028654


def _gelu_tanh(x):
    # tanh-approximate GELU (tanh -> EUP slot).
    # TODO(synk): nn.GELU() default is exact erf-GELU; difference is <1e-3 in practice.
    return 0.5 * x * (1.0 + jnp.tanh(_SQRT_2_OVER_PI * (x + 0.044715 * (x * x * x))))


# --------- Pass A: dilated 'same' conv (im2col, one MXU matmul) + BN1 partial stats ---------
def _conv_stats_kernel(xc_ref, xn_ref, w_ref, b_ref, y_ref, st_ref, *, K, dil, LT):
    # xc_ref/xn_ref: (1, C, LT) bf16  — current / next L-tile of the padded input (halo)
    # w_ref: (F1, K*C) bf16           — im2col-ordered conv weight
    # b_ref: (F1, 1) f32
    # y_ref: (1, F1, LT) f32          — conv output tile
    # st_ref: (1, F1, 2) f32          — per-tile [sum, sum_of_squares] for BN1
    x = jnp.concatenate([xc_ref[0], xn_ref[0]], axis=-1)                 # (C, 2*LT)
    # im2col: K dilated lane shifts stacked along the contraction axis (row = k*C + c).
    col = jnp.concatenate([x[:, k * dil:k * dil + LT] for k in range(K)], axis=0)
    acc = jnp.dot(w_ref[...], col, preferred_element_type=jnp.float32)  # (F1, LT) f32
    acc = acc + b_ref[...]
    y_ref[0] = acc
    st_ref[0] = jnp.concatenate(
        [jnp.sum(acc, axis=-1, keepdims=True),
         jnp.sum(acc * acc, axis=-1, keepdims=True)], axis=-1)


# --------- Pass B: BN1 normalize -> GELU -> pointwise conv + BN2 partial stats ---------
def _bn_gelu_pointwise_kernel(y1_ref, s1_ref, t1_ref, w_ref, b_ref, y2_ref, st_ref):
    # y1_ref: (1, F1, LT) f32; s1/t1: (F1, 1) folded BN1 scale/shift
    # w_ref: (F, F1) f32; b_ref: (F, 1) f32
    h = y1_ref[0] * s1_ref[...] + t1_ref[...]
    h = _gelu_tanh(h)
    acc = jnp.dot(w_ref[...], h, preferred_element_type=jnp.float32) + b_ref[...]
    y2_ref[0] = acc
    st_ref[0] = jnp.concatenate(
        [jnp.sum(acc, axis=-1, keepdims=True),
         jnp.sum(acc * acc, axis=-1, keepdims=True)], axis=-1)


# --------- Pass C: BN2 normalize -> GELU -> Dropout1d -> residual add ---------
def _bn_gelu_dropout_res_kernel(y2_ref, x_ref, s2_ref, t2_ref, drop_ref, o_ref, *, residual):
    h = _gelu_tanh(y2_ref[0] * s2_ref[...] + t2_ref[...])
    h = h * drop_ref[0]                      # Dropout1d channel mask, pre-scaled by 1/(1-p)
    if residual:
        o_ref[0] = x_ref[0] + h
    else:
        o_ref[0] = h


def like_basenji2_dilated_res_conv_block(
        x, conv_w, conv_b, bn1_gamma, bn1_beta,
        pw_w, pw_b, bn2_gamma, bn2_beta, drop_mask_scaled,
        *, dilation=1, residual=True, l_tile=128):
    """x: (N, C, L) f32; conv_w: (F1, C, K); pw_w: (F, F1, 1); bn/bias params: (F1,)/(F,).
    drop_mask_scaled: (N, F, 1) channel keep-mask already scaled by 1/(1-p)."""
    N, C, L = x.shape
    F1, C_w, K = conv_w.shape
    F = pw_w.shape[0]
    assert C_w == C
    if residual:
        assert F == C, "residual add requires filters == input channels"

    total = dilation * (K - 1)          # PyTorch padding='same' (stride=1)
    left = total // 2

    LT = l_tile if (L % l_tile == 0) else L     # lane-dense 128-multiple tiles preferred
    assert L % LT == 0 and LT >= total
    n_lt = L // LT
    Lp = (n_lt + 1) * LT                # one extra tile so the (l+1) halo block exists

    # Pad once ('same' left zeros + right zeros up to (n_lt+1)*LT) and cast to bf16 for MXU.
    x_pad = jnp.pad(x, ((0, 0), (0, 0), (left, Lp - L - left))).astype(jnp.bfloat16)

    # im2col weight layout: w2d[f, k*C + c] == conv_w[f, c, k]
    w2d = jnp.transpose(conv_w, (0, 2, 1)).reshape(F1, K * C).astype(jnp.bfloat16)

    cparams = pltpu.CompilerParams(
        dimension_semantics=("parallel", "parallel"),
        vmem_limit_bytes=48 * 1024 * 1024)

    # ---- Pass A ----
    y1, st1 = pl.pallas_call(
        functools.partial(_conv_stats_kernel, K=K, dil=dilation, LT=LT),
        out_shape=(jax.ShapeDtypeStruct((N, F1, L), jnp.float32),
                   jax.ShapeDtypeStruct((N * n_lt, F1, 2), jnp.float32)),
        grid=(N, n_lt),
        in_specs=[
            pl.BlockSpec((1, C, LT), lambda n, l: (n, 0, l)),        # current tile
            pl.BlockSpec((1, C, LT), lambda n, l: (n, 0, l + 1)),    # halo (next) tile
            pl.BlockSpec((F1, K * C), lambda n, l: (0, 0)),
            pl.BlockSpec((F1, 1), lambda n, l: (0, 0)),
        ],
        out_specs=(
            pl.BlockSpec((1, F1, LT), lambda n, l: (n, 0, l)),
            pl.BlockSpec((1, F1, 2), lambda n, l: (n * n_lt + l, 0, 0)),
        ),
        compiler_params=cparams,
    )(x_pad, x_pad, w2d, conv_b.reshape(F1, 1).astype(jnp.float32))

    # BN1 training-mode batch stats (biased variance) from the fused per-tile partials.
    cnt = float(N * L)
    s1 = jnp.sum(st1, axis=0)                                   # (F1, 2)
    mean1 = s1[:, 0] / cnt
    var1 = jnp.maximum(s1[:, 1] / cnt - mean1 * mean1, 0.0)
    inv1 = lax.rsqrt(var1 + _BN_EPS)
    scale1 = (bn1_gamma * inv1).reshape(F1, 1).astype(jnp.float32)
    shift1 = (bn1_beta - mean1 * bn1_gamma * inv1).reshape(F1, 1).astype(jnp.float32)

    wpw2d = pw_w.reshape(F, F1).astype(jnp.float32)

    # ---- Pass B ----
    y2, st2 = pl.pallas_call(
        _bn_gelu_pointwise_kernel,
        out_shape=(jax.ShapeDtypeStruct((N, F, L), jnp.float32),
                   jax.ShapeDtypeStruct((N * n_lt, F, 2), jnp.float32)),
        grid=(N, n_lt),
        in_specs=[
            pl.BlockSpec((1, F1, LT), lambda n, l: (n, 0, l)),
            pl.BlockSpec((F1, 1), lambda n, l: (0, 0)),
            pl.BlockSpec((F1, 1), lambda n, l: (0, 0)),
            pl.BlockSpec((F, F1), lambda n, l: (0, 0)),
            pl.BlockSpec((F, 1), lambda n, l: (0, 0)),
        ],
        out_specs=(
            pl.BlockSpec((1, F, LT), lambda n, l: (n, 0, l)),
            pl.BlockSpec((1, F, 2), lambda n, l: (n * n_lt + l, 0, 0)),
        ),
        compiler_params=cparams,
    )(y1, scale1, shift1, wpw2d, pw_b.reshape(F, 1).astype(jnp.float32))

    s2 = jnp.sum(st2, axis=0)                                   # (F, 2)
    mean2 = s2[:, 0] / cnt
    var2 = jnp.maximum(s2[:, 1] / cnt - mean2 * mean2, 0.0)
    inv2 = lax.rsqrt(var2 + _BN_EPS)
    scale2 = (bn2_gamma * inv2).reshape(F, 1).astype(jnp.float32)
    shift2 = (bn2_beta - mean2 * bn2_gamma * inv2).reshape(F, 1).astype(jnp.float32)

    # ---- Pass C ----
    out = pl.pallas_call(
        functools.partial(_bn_gelu_dropout_res_kernel, residual=residual),
        out_shape=jax.ShapeDtypeStruct((N, F, L), jnp.float32),
        grid=(N, n_lt),
        in_specs=[
            pl.BlockSpec((1, F, LT), lambda n, l: (n, 0, l)),
            pl.BlockSpec((1, F, LT), lambda n, l: (n, 0, l)),
            pl.BlockSpec((F, 1), lambda n, l: (0, 0)),
            pl.BlockSpec((F, 1), lambda n, l: (0, 0)),
            pl.BlockSpec((1, F, 1), lambda n, l: (n, 0, 0)),
        ],
        out_specs=pl.BlockSpec((1, F, LT), lambda n, l: (n, 0, l)),
        compiler_params=cparams,
    )(y2, x, scale2, shift2, drop_mask_scaled)

    return out


def _reference(x, conv_w, conv_b, g1, be1, pw_w, pw_b, g2, be2, drop_mask,
               *, dilation, residual):
    """Pure-JAX reference mirroring the PyTorch training-mode forward (bf16 conv inputs,
    f32 accumulate, tanh-GELU, training BN with biased variance, given dropout mask)."""
    N, C, L = x.shape
    F1, _, K = conv_w.shape
    F = pw_w.shape[0]
    total = dilation * (K - 1)
    left = total // 2
    right = total - left
    xp = jnp.pad(x, ((0, 0), (0, 0), (left, right))).astype(jnp.bfloat16)
    wb = conv_w.astype(jnp.bfloat16)
    y1 = jnp.zeros((N, F1, L), jnp.float32) + conv_b.reshape(1, -1, 1)
    for k in range(K):
        y1 = y1 + jnp.einsum("fc,ncl->nfl", wb[:, :, k],
                             xp[:, :, k * dilation:k * dilation + L],
                             preferred_element_type=jnp.float32)
    m1 = jnp.mean(y1, axis=(0, 2), keepdims=True)
    v1 = jnp.mean((y1 - m1) ** 2, axis=(0, 2), keepdims=True)
    h = (y1 - m1) * lax.rsqrt(v1 + _BN_EPS) * g1.reshape(1, -1, 1) + be1.reshape(1, -1, 1)
    h = _gelu_tanh(h)
    y2 = jnp.einsum("fc,ncl->nfl", pw_w.reshape(F, F1), h,
                    preferred_element_type=jnp.float32) + pw_b.reshape(1, -1, 1)
    m2 = jnp.mean(y2, axis=(0, 2), keepdims=True)
    v2 = jnp.mean((y2 - m2) ** 2, axis=(0, 2), keepdims=True)
    h2 = (y2 - m2) * lax.rsqrt(v2 + _BN_EPS) * g2.reshape(1, -1, 1) + be2.reshape(1, -1, 1)
    h2 = _gelu_tanh(h2)
    h2 = h2 * drop_mask
    return x + h2 if residual else h2


if __name__ == "__main__":
    # Small config consistent with the module: filters=16 (conv1d -> filters//2 = 8),
    # kernel_size=5, dilation=2, dropout=0.3, GELU, residual=True (so C_in == filters).
    N, L = 2, 256
    filters, K, dilation, p_drop = 16, 5, 2, 0.3
    F1 = filters // 2
    C_in = filters

    key = jax.random.PRNGKey(0)
    ks = jax.random.split(key, 10)
    x = jax.random.normal(ks[0], (N, C_in, L), dtype=jnp.float32)
    conv_w = 0.1 * jax.random.normal(ks[1], (F1, C_in, K), dtype=jnp.float32)
    conv_b = 0.1 * jax.random.normal(ks[2], (F1,), dtype=jnp.float32)
    bn1_g = 1.0 + 0.1 * jax.random.normal(ks[3], (F1,), dtype=jnp.float32)
    bn1_b = 0.1 * jax.random.normal(ks[4], (F1,), dtype=jnp.float32)
    pw_w = 0.1 * jax.random.normal(ks[5], (filters, F1, 1), dtype=jnp.float32)
    pw_b = 0.1 * jax.random.normal(ks[6], (filters,), dtype=jnp.float32)
    bn2_g = 1.0 + 0.1 * jax.random.normal(ks[7], (filters,), dtype=jnp.float32)
    bn2_b = 0.1 * jax.random.normal(ks[8], (filters,), dtype=jnp.float32)

    # Dropout1d training-mode channel mask (one Bernoulli per (batch, channel)),
    # pre-scaled by 1/(1-p).  TODO(synk): generated with jax.random — PyTorch's RNG
    # stream differs, but the stochastic channel-dropout semantics are identical.
    keep = jax.random.bernoulli(ks[9], 1.0 - p_drop, (N, filters))
    drop_mask = (keep.astype(jnp.float32) / (1.0 - p_drop)).reshape(N, filters, 1)

    out = like_basenji2_dilated_res_conv_block(
        x, conv_w, conv_b, bn1_g, bn1_b, pw_w, pw_b, bn2_g, bn2_b, drop_mask,
        dilation=dilation, residual=True, l_tile=128)
    out = jax.block_until_ready(out)

    ref = _reference(x, conv_w, conv_b, bn1_g, bn1_b, pw_w, pw_b, bn2_g, bn2_b,
                     drop_mask, dilation=dilation, residual=True)
    assert out.shape == (N, filters, L)
    assert jnp.allclose(out, ref, atol=1e-3, rtol=1e-3), float(jnp.max(jnp.abs(out - ref)))

    print("KERNEL_OK")
</pallas_src>

<mosaic_0001>
module attributes {stable_mosaic.version = 11 : i64} {
  func.func @_conv_stats_kernel(%arg0: i32, %arg1: i32, %arg2: memref<1x16x128xbf16, #tpu.memory_space<vmem>>, %arg3: memref<1x16x128xbf16, #tpu.memory_space<vmem>>, %arg4: memref<8x80xbf16, #tpu.memory_space<vmem>>, %arg5: memref<8x1xf32, #tpu.memory_space<vmem>>, %arg6: memref<1x8x128xf32, #tpu.memory_space<vmem>>, %arg7: memref<1x8x2xf32, #tpu.memory_space<vmem>>) attributes {dimension_semantics = [#tpu.dimension_semantics<parallel>, #tpu.dimension_semantics<parallel>], iteration_bounds = array<i64: 2, 2>, scalar_prefetch = 0 : i64, scratch_operands = 0 : i64, tpu.core_type = #tpu.core_type<tc>, window_params = [{transform_indices = @transform_0, window_bounds = array<i64: 1, 16, 128>}, {transform_indices = @transform_1, window_bounds = array<i64: 1, 16, 128>}, {pipeline_mode = #tpu.pipeline_mode<synchronous>, transform_indices = @transform_2, window_bounds = array<i64: 8, 80>}, {pipeline_mode = #tpu.pipeline_mode<synchronous>, transform_indices = @transform_3, window_bounds = array<i64: 8, 1>}, {transform_indices = @transform_4, window_bounds = array<i64: 1, 8, 128>}, {transform_indices = @transform_5, window_bounds = array<i64: 1, 8, 2>}]} {
    %c0 = arith.constant 0 : index
    %c0_0 = arith.constant 0 : index
    %c0_1 = arith.constant 0 : index
    %0 = vector.load %arg2[%c0, %c0_0, %c0_1] : memref<1x16x128xbf16, #tpu.memory_space<vmem>>, vector<1x16x128xbf16>
    %1 = vector.shape_cast %0 : vector<1x16x128xbf16> to vector<16x128xbf16>
    %c0_2 = arith.constant 0 : index
    %c0_3 = arith.constant 0 : index
    %c0_4 = arith.constant 0 : index
    %2 = vector.load %arg3[%c0_2, %c0_3, %c0_4] : memref<1x16x128xbf16, #tpu.memory_space<vmem>>, vector<1x16x128xbf16>
    %3 = vector.shape_cast %2 : vector<1x16x128xbf16> to vector<16x128xbf16>
    %4 = tpu.concatenate %1, %3 in 1 : vector<16x128xbf16>, vector<16x128xbf16> -> vector<16x256xbf16>
    %5 = vector.extract_strided_slice %4 {offsets = [0, 0], sizes = [16, 128], strides = [1, 1]} : vector<16x256xbf16> to vector<16x128xbf16>
    %6 = vector.extract_strided_slice %4 {offsets = [0, 2], sizes = [16, 128], strides = [1, 1]} : vector<16x256xbf16> to vector<16x128xbf16>
    %7 = vector.extract_strided_slice %4 {offsets = [0, 4], sizes = [16, 128], strides = [1, 1]} : vector<16x256xbf16> to vector<16x128xbf16>
    %8 = vector.extract_strided_slice %4 {offsets = [0, 6], sizes = [16, 128], strides = [1, 1]} : vector<16x256xbf16> to vector<16x128xbf16>
    %9 = vector.extract_strided_slice %4 {offsets = [0, 8], sizes = [16, 128], strides = [1, 1]} : vector<16x256xbf16> to vector<16x128xbf16>
    %10 = tpu.concatenate %5, %6, %7, %8, %9 in 0 : vector<16x128xbf16>, vector<16x128xbf16>, vector<16x128xbf16>, vector<16x128xbf16>, vector<16x128xbf16> -> vector<80x128xbf16>
    %c0_5 = arith.constant 0 : index
    %c0_6 = arith.constant 0 : index
    %11 = vector.load %arg4[%c0_5, %c0_6] : memref<8x80xbf16, #tpu.memory_space<vmem>>, vector<8x80xbf16>
    %cst = arith.constant dense<0.000000e+00> : vector<8x128xf32>
    %12 = tpu.matmul %11, %10, %cst {dimension_numbers = #tpu.dot_dimension_numbers<[1], [0], [0], [1], [0, 0, 1, 1], [], []>} : vector<8x80xbf16>, vector<80x128xbf16>, vector<8x128xf32> -> vector<8x128xf32>
    %c0_7 = arith.constant 0 : index
    %c0_8 = arith.constant 0 : index
    %13 = vector.load %arg5[%c0_7, %c0_8] : memref<8x1xf32, #tpu.memory_space<vmem>>, vector<8x1xf32>
    %14 = vector.broadcast %13 : vector<8x1xf32> to vector<8x128xf32>
    %15 = arith.addf %12, %14 : vector<8x128xf32>
    %c0_9 = arith.constant 0 : index
    %c0_10 = arith.constant 0 : index
    %c0_11 = arith.constant 0 : index
    %16 = vector.load %arg6[%c0_9, %c0_10, %c0_11] : memref<1x8x128xf32, #tpu.memory_space<vmem>>, vector<1x8x128xf32>
    %17 = vector.shape_cast %16 : vector<1x8x128xf32> to vector<8x128xf32>
    %18 = vector.shape_cast %15 : vector<8x128xf32> to vector<1x8x128xf32>
    tpu.vector_store %arg6[%c0_9, %c0_10, %c0_11], %18 {strides = array<i32>} : memref<1x8x128xf32, #tpu.memory_space<vmem>>, vector<1x8x128xf32>,
    %cst_12 = arith.constant dense<0.000000e+00> : vector<8xf32>
    %19 = vector.multi_reduction <add>, %15, %cst_12 [1] : vector<8x128xf32> to vector<8xf32>
    %20 = vector.shape_cast %19 : vector<8xf32> to vector<8x1xf32>
    %21 = arith.mulf %15, %15 : vector<8x128xf32>
    %cst_13 = arith.constant dense<0.000000e+00> : vector<8xf32>
    %22 = vector.multi_reduction <add>, %21, %cst_13 [1] : vector<8x128xf32> to vector<8xf32>
    %23 = vector.shape_cast %22 : vector<8xf32> to vector<8x1xf32>
    %24 = tpu.concatenate %20, %23 in 1 : vector<8x1xf32>, vector<8x1xf32> -> vector<8x2xf32>
    %c0_14 = arith.constant 0 : index
    %c0_15 = arith.constant 0 : index
    %c0_16 = arith.constant 0 : index
    %25 = vector.load %arg7[%c0_14, %c0_15, %c0_16] : memref<1x8x2xf32, #tpu.memory_space<vmem>>, vector<1x8x2xf32>
    %26 = vector.shape_cast %25 : vector<1x8x2xf32> to vector<8x2xf32>
    %27 = vector.shape_cast %24 : vector<8x2xf32> to vector<1x8x2xf32>
    tpu.vector_store %arg7[%c0_14, %c0_15, %c0_16], %27 {strides = array<i32>} : memref<1x8x2xf32, #tpu.memory_space<vmem>>, vector<1x8x2xf32>,
    return
  }
  func.func @transform_0(%arg0: i32, %arg1: i32) -> (i32, i32, i32) {
    %c0_i32 = arith.constant 0 : i32
    %c0_i32_0 = arith.constant 0 : i32
    return %arg0, %c0_i32, %arg1 : i32, i32, i32
  }
  func.func @transform_1(%arg0: i32, %arg1: i32) -> (i32, i32, i32) {
    %c1_i32 = arith.constant 1 : i32
    %0 = arith.addi %arg1, %c1_i32 : i32
    %c0_i32 = arith.constant 0 : i32
    %c0_i32_0 = arith.constant 0 : i32
    return %arg0, %c0_i32, %0 : i32, i32, i32
  }
  func.func @transform_2(%arg0: i32, %arg1: i32) -> (i32, i32) {
    %c0_i32 = arith.constant 0 : i32
    %c0_i32_0 = arith.constant 0 : i32
    %c0_i32_1 = arith.constant 0 : i32
    return %c0_i32, %c0_i32_0 : i32, i32
  }
  func.func @transform_3(%arg0: i32, %arg1: i32) -> (i32, i32) {
    %c0_i32 = arith.constant 0 : i32
    %c0_i32_0 = arith.constant 0 : i32
    %c0_i32_1 = arith.constant 0 : i32
    return %c0_i32, %c0_i32_0 : i32, i32
  }
  func.func @transform_4(%arg0: i32, %arg1: i32) -> (i32, i32, i32) {
    %c0_i32 = arith.constant 0 : i32
    %c0_i32_0 = arith.constant 0 : i32
    return %arg0, %c0_i32, %arg1 : i32, i32, i32
  }
  func.func @transform_5(%arg0: i32, %arg1: i32) -> (i32, i32, i32) {
    %c2_i32 = arith.constant 2 : i32
    %0 = arith.muli %arg0, %c2_i32 : i32
    %1 = arith.addi %0, %arg1 : i32
    %c0_i32 = arith.constant 0 : i32
    %c0_i32_0 = arith.constant 0 : i32
    %c0_i32_1 = arith.constant 0 : i32
    return %1, %c0_i32, %c0_i32_0 : i32, i32, i32
  }
}

</mosaic_0001>

<llo_original>
// kernel: tpu_custom_call.1
$region0: #{tpu_custom_call.1}
  #allocation0 [shape = 'u32[]', space=smem, size = 0x4, offset = 0x4, fixed_abs, tag = 'smem constant byte address 0x4 - core index']
  #allocation1 [shape = 'u32[144,128]{1,0:T(1,128)}', space=vmem, size = 0x12000, scoped, tag = 'internal scratch']
  %s0 = inlined_call_operand.hbm [shape: bf16[2,16,384], index: 0, kind: input, shape index: {}]
  %s1 = inlined_call_operand.hbm [shape: bf16[2,16,384], index: 1, kind: input, shape index: {}]
  %s2 = inlined_call_operand.vmem [shape: bf16[8,80], index: 2, kind: input, shape index: {}]
  %s3 = inlined_call_operand.vmem [shape: f32[8,1], index: 3, kind: input, shape index: {}]
  %s4 = inlined_call_operand.hbm [shape: f32[2,8,256], index: 4, kind: output, shape index: {0}]
  %s5 = inlined_call_operand.vmem [shape: f32[4,8,2], index: 5, kind: output, shape index: {1}]
  %6 = xla_tuple %s4, %s5
  %s7 = sld [smem:[#allocation0]]
  $region65: #{tpu_custom_call.1} parent=0
    _
  %s9 = ssub.s32 1, %s7
  %s10 = scalar_select 0, %s9, %s7
  $region1: #{tpu_custom_call.1} parent=0
    #allocation2 [shape = 'u8[8192]{0}', space=vmem, size = 0x2000, scoped, tag = 'input window, operand 0']
    #allocation3 [shape = 's32[2]{0}', space=sflag, size = 0x8, scoped, tag = 'scoped memory for tpu_custom_call.1']
    #allocation4 [shape = 's32[2]{0}', space=sflag, size = 0x8, scoped, tag = 'scoped memory for tpu_custom_call.1']
    #allocation5 [shape = 'u8[8192]{0}', space=vmem, size = 0x2000, scoped, tag = 'input window, operand 1']
    #allocation6 [shape = 's32[2]{0}', space=sflag, size = 0x8, scoped, tag = 'scoped memory for tpu_custom_call.1']
    #allocation7 [shape = 'u8[8192]{0}', space=vmem, size = 0x2000, scoped, tag = 'output window, operand 0']
    %11 = vsyncpa [#allocation3], 0
    %s12 = scalar_lea.sflag [#allocation3], 1
    %13 = vsyncpa %s12, 0
    %14 = vsyncpa [#allocation6], 0
    %s15 = scalar_lea.sflag [#allocation6], 1
    %16 = vsyncpa %s15, 0
    %17 = vsyncpa [#allocation4], 0
    %s18 = scalar_lea.sflag [#allocation4], 1
    %19 = vsyncpa %s18, 0
    loop: start=0, step=1, limit=6
    $region2: #{tpu_custom_call.1} parent=1 // loop_pre_header
      _
    $region3: #{tpu_custom_call.1} parent=1 // loop_header
      %s21 = sphi 0, %s25
      %p22 = scmp.ge.s32.totalorder %s21, 6
      %s28 = sphi 0, %s40
      %s29 = sphi 0, %s36
      %s30 = sphi 0, %s28
      %s31 = sphi 0, %s29
      %s32 = sphi 0, %s30
      %s33 = sphi 0, %s31
      %s45 = sphi 0, %s47
      %s48 = sphi 0, %s45
      %s49 = sphi 0, %s48
      %s65 = sphi 0, %s49
      %s75 = sphi 0, %s77
      %s78 = sphi 0, %s75
      %s79 = sphi 0, %s78
      %s95 = sphi 0, %s79
      %s99 = sphi 0, %s99
      %s101 = sphi 0, %s99
      %s102 = sphi 0, %s101
      %s116 = sphi 0, %s102
      %s120 = sphi 0, %s120
      %s122 = sphi 0, %s120
      %s123 = sphi 0, %s122
      %s137 = sphi 0, %s123
      %s145 = sphi 0, %s147
      %s148 = sphi 0, %s145
      %s149 = sphi 0, %s148
      %s165 = sphi 0, %s149
      %s175 = sphi 0, %s177
      %s178 = sphi 0, %s175
      %s179 = sphi 0, %s178
      %s195 = sphi 0, %s179
    $region4: #{tpu_custom_call.1} parent=1 // loop_header_branch
      %24 = sbr.rel (%p22) target = $region8
    $region5: #{tpu_custom_call.1} parent=1 // loop_body
      %s26 = ssub.s32 %s21, 1
      %s27 = ssub.s32 %s21, 2
      %s34 = sadd.s32 1, %s29
      %p35 = scmp.ge.s32.totalorder %s34, 2
      %s36 = scalar_select %p35, 0, %s34
      %s37 = sadd.s32 1, %s28
      %s38 = scalar_select %p35, %s37, %s28
      %p39 = scmp.ge.s32.totalorder %s38, 2
      %s40 = scalar_select %p39, 0, %s38
      %s41 = ssub.s32 %s28, %s40
      %s42 = ssub.s32 %s29, %s36
      %s43 = sor.u32 %s41, %s42
      %p44 = scmp.eq.s32.totalorder %s43, 0
      %s46 = sadd.s32 %s45, 1
      %s47 = scalar_select %p44, %s45, %s46
      %p50 = pneg %p44
      %p51 = scmp.eq.s32.totalorder %s21, 3
      %p52 = por %p50, %p51
      %p53 = scmp.ne.s32.totalorder %s45, %s48
      %p54 = scmp.eq.s32.totalorder %s21, 0
      %p55 = por %p53, %p54
      %p56 = scmp.ne.s32.totalorder %s45, %s48
      %p57 = scmp.eq.s32.totalorder %s26, 3
      %p58 = por %p56, %p57
      %p59 = scmp.ne.s32.totalorder %s48, %s49
      %p60 = scmp.eq.s32.totalorder %s26, 0
      %p61 = por %p59, %p60
      %p62 = scmp.ne.s32.totalorder %s48, %s49
      %p63 = scmp.eq.s32.totalorder %s27, 3
      %p64 = por %p62, %p63
      %p66 = scmp.ne.s32.totalorder %s49, %s65
      %p67 = scmp.eq.s32.totalorder %s27, 0
      %p68 = por %p66, %p67
      %s69 = sadd.s32 %s29, 1
      %s70 = sadd.s32 %s36, 1
      %s71 = ssub.s32 %s28, %s40
      %s72 = ssub.s32 %s69, %s70
      %s73 = sor.u32 %s71, %s72
      %p74 = scmp.eq.s32.totalorder %s73, 0
      %s76 = sadd.s32 %s75, 1
      %s77 = scalar_select %p74, %s75, %s76
      %p80 = pneg %p74
      %p81 = scmp.eq.s32.totalorder %s21, 3
      %p82 = por %p80, %p81
      %p83 = scmp.ne.s32.totalorder %s75, %s78
      %p84 = scmp.eq.s32.totalorder %s21, 0
      %p85 = por %p83, %p84
      %p86 = scmp.ne.s32.totalorder %s75, %s78
      %p87 = scmp.eq.s32.totalorder %s26, 3
      %p88 = por %p86, %p87
      %p89 = scmp.ne.s32.totalorder %s78, %s79
      %p90 = scmp.eq.s32.totalorder %s26, 0
      %p91 = por %p89, %p90
      %p92 = scmp.ne.s32.totalorder %s78, %s79
      %p93 = scmp.eq.s32.totalorder %s27, 3
      %p94 = por %p92, %p93
      %p96 = scmp.ne.s32.totalorder %s79, %s95
      %p97 = scmp.eq.s32.totalorder %s27, 0
      %p98 = por %p96, %p97
      %s100 = sadd.s32 %s99, 1
      %p103 = scmp.eq.s32.totalorder %s21, 3
      %p104 = scmp.ne.s32.totalorder %s99, %s101
      %p105 = scmp.eq.s32.totalorder %s21, 0
      %p106 = por %p104, %p105
      %p107 = scmp.ne.s32.totalorder %s99, %s101
      %p108 = scmp.eq.s32.totalorder %s26, 3
      %p109 = por %p107, %p108
      %p110 = scmp.ne.s32.totalorder %s101, %s102
      %p111 = scmp.eq.s32.totalorder %s26, 0
      %p112 = por %p110, %p111
      %p113 = scmp.ne.s32.totalorder %s101, %s102
      %p114 = scmp.eq.s32.totalorder %s27, 3
      %p115 = por %p113, %p114
      %p117 = scmp.ne.s32.totalorder %s102, %s116
      %p118 = scmp.eq.s32.totalorder %s27, 0
      %p119 = por %p117, %p118
      %s121 = sadd.s32 %s120, 1
      %p124 = scmp.eq.s32.totalorder %s21, 3
      %p125 = scmp.ne.s32.totalorder %s120, %s122
      %p126 = scmp.eq.s32.totalorder %s21, 0
      %p127 = por %p125, %p126
      %p128 = scmp.ne.s32.totalorder %s120, %s122
      %p129 = scmp.eq.s32.totalorder %s26, 3
      %p130 = por %p128, %p129
      %p131 = scmp.ne.s32.totalorder %s122, %s123
      %p132 = scmp.eq.s32.totalorder %s26, 0
      %p133 = por %p131, %p132
      %p134 = scmp.ne.s32.totalorder %s122, %s123
      %p135 = scmp.eq.s32.totalorder %s27, 3
      %p136 = por %p134, %p135
      %p138 = scmp.ne.s32.totalorder %s123, %s137
      %p139 = scmp.eq.s32.totalorder %s27, 0
      %p140 = por %p138, %p139
      %s141 = ssub.s32 %s28, %s40
      %s142 = ssub.s32 %s29, %s36
      %s143 = sor.u32 %s141, %s142
      %p144 = scmp.eq.s32.totalorder %s143, 0
      %s146 = sadd.s32 %s145, 1
      %s147 = scalar_select %p144, %s145, %s146
      %p150 = pneg %p144
      %p151 = scmp.eq.s32.totalorder %s21, 3
      %p152 = por %p150, %p151
      %p153 = scmp.ne.s32.totalorder %s145, %s148
      %p154 = scmp.eq.s32.totalorder %s21, 0
      %p155 = por %p153, %p154
      %p156 = scmp.ne.s32.totalorder %s145, %s148
      %p157 = scmp.eq.s32.totalorder %s26, 3
      %p158 = por %p156, %p157
      %p159 = scmp.ne.s32.totalorder %s148, %s149
      %p160 = scmp.eq.s32.totalorder %s26, 0
      %p161 = por %p159, %p160
      %p162 = scmp.ne.s32.totalorder %s148, %s149
      %p163 = scmp.eq.s32.totalorder %s27, 3
      %p164 = por %p162, %p163
      %p166 = scmp.ne.s32.totalorder %s149, %s165
      %p167 = scmp.eq.s32.totalorder %s27, 0
      %p168 = por %p166, %p167
      %s169 = smul.u32 %s28, 2
      %s170 = sadd.s32 %s169, %s29
      %s171 = smul.u32 %s40, 2
      %s172 = sadd.s32 %s171, %s36
      %s173 = ssub.s32 %s170, %s172
      %p174 = scmp.eq.s32.totalorder %s173, 0
      %s176 = sadd.s32 %s175, 1
      %s177 = scalar_select %p174, %s175, %s176
      %p180 = pneg %p174
      %p181 = scmp.eq.s32.totalorder %s21, 3
      %p182 = por %p180, %p181
      %p183 = scmp.ne.s32.totalorder %s175, %s178
      %p184 = scmp.eq.s32.totalorder %s21, 0
      %p185 = por %p183, %p184
      %p186 = scmp.ne.s32.totalorder %s175, %s178
      %p187 = scmp.eq.s32.totalorder %s26, 3
      %p188 = por %p186, %p187
      %p189 = scmp.ne.s32.totalorder %s178, %s179
      %p190 = scmp.eq.s32.totalorder %s26, 0
      %p191 = por %p189, %p190
      %p192 = scmp.ne.s32.totalorder %s178, %s179
      %p193 = scmp.eq.s32.totalorder %s27, 3
      %p194 = por %p192, %p193
      %p196 = scmp.ne.s32.totalorder %s179, %s195
      %p197 = scmp.eq.s32.totalorder %s27, 0
      %p198 = por %p196, %p197
      %p199 = scmp.le.s32.totalorder 1, %s21
      %p200 = scmp.lt.s32.totalorder %s21, 5
      %p201 = pnand %p199, %p200
      %p202 = pneg %p201
      // Predicated region
      $region9: #{tpu_custom_call.1} parent=5 // pred_check
        _
      $region10: #{tpu_custom_call.1} parent=5 // pred_check_branch
        %204 = sbr.rel (%p201) target = $region12
      $region11: #{tpu_custom_call.1} parent=5 // pred_region
        %s205 = ssub.s32 %s21, 1
        // Predicated region
        $region13: #{tpu_custom_call.1} parent=11 // pred_check
          %p206 = pneg %p112
        $region14: #{tpu_custom_call.1} parent=11 // pred_check_branch
          %208 = sbr.rel (%p206) target = $region16
        $region15: #{tpu_custom_call.1} parent=11 // pred_region
          _
        $region16: #{tpu_custom_call.1} parent=11 // pred_fallthru
          _
        // Predicated region
        $region17: #{tpu_custom_call.1} parent=11 // pred_check
          %p209 = pneg %p133
        $region18: #{tpu_custom_call.1} parent=11 // pred_check_branch
          %211 = sbr.rel (%p209) target = $region20
        $region19: #{tpu_custom_call.1} parent=11 // pred_region
          _
        $region20: #{tpu_custom_call.1} parent=11 // pred_fallthru
          _
      $region12: #{tpu_custom_call.1} parent=5 // pred_fallthru
        _
      %p212 = scmp.lt.s32.totalorder %s21, 4
      // Predicated region
      $region21: #{tpu_custom_call.1} parent=5 // pred_check
        %p213 = pneg %p212
      $region22: #{tpu_custom_call.1} parent=5 // pred_check_branch
        %215 = sbr.rel (%p213) target = $region24
      $region23: #{tpu_custom_call.1} parent=5 // pred_region
        // Predicated region
        $region25: #{tpu_custom_call.1} parent=23 // pred_check
          %p216 = pneg %p55
        $region26: #{tpu_custom_call.1} parent=23 // pred_check_branch
          %218 = sbr.rel (%p216) target = $region28
        $region27: #{tpu_custom_call.1} parent=23 // pred_region
          %s219 = sand.u32 %s45, 1
          %s220 = scalar_lea.sflag [#allocation3], %s219
          %s221 = sand.u32 %s45, 1
          %s222 = smul.addr %s221, 8
          %s223 = scalar_lea.vmem [#allocation2], %s222
          %s225 = ssub.s32 128, 128
          %226 = vsyncadd %s220, %s225
          %s227 = smul.addr %s28, 6
          %s228 = sadd.s32 %s29, %s227
          %s229 = smul.addr %s228, 64
          %s230 = scalar_lea.hbm %s0, %s229
          %s231 = sshll.u32 %s223, 4
          %s232 = int_to_ptr.vmem [resolvable:$true] %s231
          %237 = dma.hbm_to_vmem [thread:$0]  %s230, 128, %s232, %s220, 192, 64, 4
        $region28: #{tpu_custom_call.1} parent=23 // pred_fallthru
          _
        // Predicated region
        $region29: #{tpu_custom_call.1} parent=23 // pred_check
          %p238 = pneg %p85
        $region30: #{tpu_custom_call.1} parent=23 // pred_check_branch
          %240 = sbr.rel (%p238) target = $region32
        $region31: #{tpu_custom_call.1} parent=23 // pred_region
          %s241 = sand.u32 %s75, 1
          %s242 = scalar_lea.sflag [#allocation6], %s241
          %s243 = sand.u32 %s75, 1
          %s244 = smul.addr %s243, 8
          %s245 = scalar_lea.vmem [#allocation5], %s244
          %s246 = sadd.s32 %s29, 1
          %s248 = ssub.s32 128, 128
          %249 = vsyncadd %s242, %s248
          %s250 = smul.addr %s28, 6
          %s251 = sadd.s32 %s246, %s250
          %s252 = smul.addr %s251, 64
          %s253 = scalar_lea.hbm %s1, %s252
          %s254 = sshll.u32 %s245, 4
          %s255 = int_to_ptr.vmem [resolvable:$true] %s254
          %260 = dma.hbm_to_vmem [thread:$0]  %s253, 128, %s255, %s242, 192, 64, 4
        $region32: #{tpu_custom_call.1} parent=23 // pred_fallthru
          _
      $region24: #{tpu_custom_call.1} parent=5 // pred_fallthru
        _
      %p261 = scmp.le.s32.totalorder 1, %s21
      %p262 = scmp.lt.s32.totalorder %s21, 5
      %p263 = pnand %p261, %p262
      %p264 = pneg %p263
      // Predicated region
      $region33: #{tpu_custom_call.1} parent=5 // pred_check
        _
      $region34: #{tpu_custom_call.1} parent=5 // pred_check_branch
        %266 = sbr.rel (%p263) target = $region36
      $region35: #{tpu_custom_call.1} parent=5 // pred_region
        %s267 = ssub.s32 %s21, 1
        %s268 = sand.u32 %s48, 1
        %s269 = scalar_lea.sflag [#allocation3], %s268
        %s270 = sand.u32 %s48, 1
        %s271 = smul.addr %s270, 8
        %s272 = scalar_lea.vmem [#allocation2], %s271
        // Predicated region
        $region37: #{tpu_custom_call.1} parent=35 // pred_check
          %p273 = pneg %p61
        $region38: #{tpu_custom_call.1} parent=35 // pred_check_branch
          %275 = sbr.rel (%p273) target = $region40
        $region39: #{tpu_custom_call.1} parent=35 // pred_region
          %276 = dma.done %s269, 128
        $region40: #{tpu_custom_call.1} parent=35 // pred_fallthru
          _
        %s277 = sand.u32 %s78, 1
        %s278 = scalar_lea.sflag [#allocation6], %s277
        %s279 = sand.u32 %s78, 1
        %s280 = smul.addr %s279, 8
        %s281 = scalar_lea.vmem [#allocation5], %s280
        // Predicated region
        $region41: #{tpu_custom_call.1} parent=35 // pred_check
          %p282 = pneg %p91
        $region42: #{tpu_custom_call.1} parent=35 // pred_check_branch
          %284 = sbr.rel (%p282) target = $region44
        $region43: #{tpu_custom_call.1} parent=35 // pred_region
          %285 = dma.done %s278, 128
        $region44: #{tpu_custom_call.1} parent=35 // pred_fallthru
          _
        %s286 = sand.u32 %s48, 1
        %s287 = scalar_lea.sflag [#allocation3], %s286
        %s288 = sand.u32 %s48, 1
        %s289 = smul.addr %s288, 8
        %s290 = scalar_lea.vmem [#allocation2], %s289
        %p291 = pneg %p61
        %p292 = pneg %p58
        %s293 = sand.u32 %s78, 1
        %s294 = scalar_lea.sflag [#allocation6], %s293
        %s295 = sand.u32 %s78, 1
        %s296 = smul.addr %s295, 8
        %s297 = scalar_lea.vmem [#allocation5], %s296
        %p298 = pneg %p91
        %p299 = pneg %p88
        %p300 = pneg %p112
        %p301 = pneg %p109
        %p302 = pneg %p133
        %p303 = pneg %p130
        %p304 = pneg %p161
        %p305 = pneg %p158
        %s306 = sand.u32 %s148, 1
        %s307 = scalar_lea.sflag [#allocation4], %s306
        %s308 = sand.u32 %s148, 1
        %s309 = smul.addr %s308, 8
        %s310 = scalar_lea.vmem [#allocation7], %s309
        %p311 = pneg %p191
        %p312 = pneg %p188
        %s313 = smul.u32 %s30, 2
        %s314 = sadd.s32 %s313, %s31
        %p315 = scmp.lt.s32.totalorder %s314, 3
        %s316 = scalar_select %p315, %s314, 3
        %s317 = smul.addr %s316, 8
        %s318 = scalar_lea.vmem %s5, %s317
        %s319 = sadd.s32 %s31, 1
        %s320 = smul.u32 %s30, 2
        %s321 = sadd.s32 %s320, %s31
        %p322 = scmp.lt.s32.totalorder %s321, 3
        %s323 = scalar_select %p322, %s321, 3
        %s324 = smul.addr %s323, 8
        %s325 = scalar_lea.vmem %s5, %s324
        %s326 = smul.u32 %s30, 2
        %s327 = sadd.s32 %s326, %s31
        %v329 = vld [vmem:[%s272] sm:$0xf]
        %v330 = vld [vmem:[%s272 + $0x4] sm:$0xf]
        %v331 = vld [vmem:[%s281] sm:$0xf]
        %v332 = vld [vmem:[%s281 + $0x4] sm:$0xf]
        %v335 = vunpack.c.l.b16 %v329
        %v336 = vunpack.c.l.b16 %v330
        %v337 = vpack.c.b16 %v336, %v335
        %v341 = vunpack.c.l.b16 %v331
        %v342 = vunpack.c.l.b16 %v332
        %v343 = vpack.c.b16 %v342, %v341
        %344 = vrot.lane.b32.xlu0 %v337, 126
        %v345 = vpop.permute.xlu0 %344
        %346 = vrot.lane.b32.xlu0 %v343, 126
        %v347 = vpop.permute.xlu0 %346
        %vm348 = vcmask 1031168
        %v349 = vsel %vm348, %v345, %v347
        %351 = vrot.lane.b32.xlu0 %v337, 124
        %v352 = vpop.permute.xlu0 %351
        %353 = vrot.lane.b32.xlu0 %v343, 124
        %v354 = vpop.permute.xlu0 %353
        %vm355 = vcmask 1014784
        %v356 = vsel %vm355, %v352, %v354
        %358 = vrot.lane.b32.xlu0 %v337, 122
        %v359 = vpop.permute.xlu0 %358
        %360 = vrot.lane.b32.xlu0 %v343, 122
        %v361 = vpop.permute.xlu0 %360
        %vm362 = vcmask 998400
        %v363 = vsel %vm362, %v359, %v361
        %365 = vrot.lane.b32.xlu0 %v337, 120
        %v366 = vpop.permute.xlu0 %365
        %367 = vrot.lane.b32.xlu0 %v343, 120
        %v368 = vpop.permute.xlu0 %367
        %vm369 = vcmask 982016
        %v370 = vsel %vm369, %v366, %v368
        %v372 = vld [vmem:[%s2] sm:$0xf]
        %v373 = vld [vmem:[%s3] sm:$0xff]
        %375 = vset.pattern.permute.xlu0 0
        %376 = vperm.xlu0 %375, %v373
        %v377 = vpop.permute.xlu0 %376
        %vm379 = vcmask 654336
        %v381 = vsel %vm379, %v372, 0
        %383 = vmatprep.subr.bf16.mxu0 0
        %384 = vmatpush1.bf16.msra.mxu0 0
        %385 = vmatprep.subr.bf16.mxu0 0
        %386 = vmatpush1.bf16.msra.mxu0 0
        %387 = vmatprep.subr.bf16.mxu0 0
        %388 = vmatpush1.bf16.msra.mxu0 0
        %389 = vmatprep.subr.bf16.mxu0 0
        %390 = vmatpush1.bf16.msra.mxu0 %v370
        %391 = vmatprep.subr.bf16.mxu0 0
        %392 = vmatpush1.bf16.msra.mxu0 %v363
        %393 = vmatprep.subr.bf16.mxu0 0
        %394 = vmatpush1.bf16.msra.mxu0 %v356
        %395 = vmatprep.subr.bf16.mxu0 0
        %396 = vmatpush1.bf16.msra.mxu0 %v349
        %397 = vmatprep.subr.bf16.mxu0 0
        %398 = vmatpush1.bf16.msra.mxu0 %v337
        %399 = vmatprep.subr.bf16.mxu0 0
        %400 = vmatpush2.bf16.msra.mxu0 0
        %401 = vmatprep.subr.bf16.mxu0 0
        %402 = vmatpush2.bf16.msra.mxu0 0
        %403 = vmatprep.subr.bf16.mxu0 0
        %404 = vmatpush2.bf16.msra.mxu0 0
        %405 = vmatprep.subr.bf16.mxu0 0
        %406 = vmatpush2.bf16.msra.mxu0 0
        %407 = vmatprep.subr.bf16.mxu0 0
        %408 = vmatpush2.bf16.msra.mxu0 0
        %409 = vmatprep.subr.bf16.mxu0 0
        %410 = vmatpush2.bf16.msra.mxu0 0
        %411 = vmatprep.subr.bf16.mxu0 0
        %412 = vmatpush2.bf16.msra.mxu0 0
        %413 = vmatprep.subr.bf16.mxu0 0
        %414 = vmatpush2.bf16.msra.mxu0 0
        %415 = vmatprep.mubr.bf16.mxu0 0
        %416 = vmatmul.mubr.bf16.gmra.mxu0 %v381
        %v417 = vpop.f32.mrf.mxu0
        %v418 = vadd.f32 %v377, %v417
        %v419 = vpop.f32.mrf.mxu0
        %v420 = vpop.f32.mrf.mxu0
        %v421 = vpop.f32.mrf.mxu0
        %422 = vdwg.mxu0
        %423 = vst [vmem:[%s310] sm:$0xff] %v418
        %424 = vadd.xlane.f32.xlu0 %v418
        %v425 = vpop.xlane.xlu0 %424
        %v426 = vmul.f32 %v418, %v418
        %427 = vadd.xlane.f32.xlu0 %v426
        %v428 = vpop.xlane.xlu0 %427
        %vm429 = vcmask 7168
        %v430 = vsel %vm429, %v425, %v428
        %vm431 = vcmask 15360
        %432 = vst.msk [vmem:[%s325] sm:$0xff] %vm431, %v430
        %s433 = sand.u32 %s148, 1
        %s434 = scalar_lea.sflag [#allocation4], %s433
        %s435 = sand.u32 %s148, 1
        %s436 = smul.addr %s435, 8
        %s437 = scalar_lea.vmem [#allocation7], %s436
        %s438 = smul.u32 %s30, 2
        %s439 = sadd.s32 %s438, %s31
        %p440 = scmp.lt.s32.totalorder %s439, 3
        %s441 = scalar_select %p440, %s439, 3
        %s442 = smul.addr %s441, 8
        %s443 = scalar_lea.vmem %s5, %s442
        // Predicated region
        $region45: #{tpu_custom_call.1} parent=35 // pred_check
          %p444 = pneg %p158
        $region46: #{tpu_custom_call.1} parent=35 // pred_check_branch
          %446 = sbr.rel (%p444) target = $region48
        $region47: #{tpu_custom_call.1} parent=35 // pred_region
          %s448 = ssub.s32 128, 128
          %449 = vsyncadd %s434, %s448
          %s450 = smul.addr %s30, 2
          %s451 = sadd.s32 %s31, %s450
          %s452 = smul.addr %s451, 128
          %s453 = scalar_lea.hbm %s4, %s452
          %s455 = sshll.u32 %s437, 4
          %s456 = int_to_ptr.vmem [resolvable:$true] %s455
          %458 = dma.vmem_to_hbm [thread:$0]  %s456, 128, %s453, %s434
        $region48: #{tpu_custom_call.1} parent=35 // pred_fallthru
          _
        // Predicated region
        $region49: #{tpu_custom_call.1} parent=35 // pred_check
          %p459 = pneg %p188
        $region50: #{tpu_custom_call.1} parent=35 // pred_check_branch
          %461 = sbr.rel (%p459) target = $region52
        $region51: #{tpu_custom_call.1} parent=35 // pred_region
          %s462 = smul.u32 %s30, 2
          %s463 = sadd.s32 %s462, %s31
        $region52: #{tpu_custom_call.1} parent=35 // pred_fallthru
          _
      $region36: #{tpu_custom_call.1} parent=5 // pred_fallthru
        _
      %p464 = scmp.le.s32.totalorder 2, %s21
      // Predicated region
      $region53: #{tpu_custom_call.1} parent=5 // pred_check
        %p465 = pneg %p464
      $region54: #{tpu_custom_call.1} parent=5 // pred_check_branch
        %467 = sbr.rel (%p465) target = $region56
      $region55: #{tpu_custom_call.1} parent=5 // pred_region
        %s468 = ssub.s32 %s21, 2
        // Predicated region
        $region57: #{tpu_custom_call.1} parent=55 // pred_check
          %p469 = pneg %p164
        $region58: #{tpu_custom_call.1} parent=55 // pred_check_branch
          %471 = sbr.rel (%p469) target = $region60
        $region59: #{tpu_custom_call.1} parent=55 // pred_region
          %s472 = sand.u32 %s149, 1
          %s473 = scalar_lea.sflag [#allocation4], %s472
          %s474 = sand.u32 %s149, 1
          %s475 = smul.addr %s474, 8
          %s476 = scalar_lea.vmem [#allocation7], %s475
          %477 = dma.done %s473, 128
        $region60: #{tpu_custom_call.1} parent=55 // pred_fallthru
          _
        // Predicated region
        $region61: #{tpu_custom_call.1} parent=55 // pred_check
          %p478 = pneg %p194
        $region62: #{tpu_custom_call.1} parent=55 // pred_check_branch
          %480 = sbr.rel (%p478) target = $region64
        $region63: #{tpu_custom_call.1} parent=55 // pred_region
          %s481 = smul.u32 %s32, 2
          %s482 = sadd.s32 %s481, %s33
          %p483 = scmp.lt.s32.totalorder %s482, 3
          %s484 = scalar_select %p483, %s482, 3
          %s485 = smul.addr %s484, 8
          %s486 = scalar_lea.vmem %s5, %s485
        $region64: #{tpu_custom_call.1} parent=55 // pred_fallthru
          _
      $region56: #{tpu_custom_call.1} parent=5 // pred_fallthru
        _
    $region6: #{tpu_custom_call.1} parent=1 // loop_footer
      %s25 = sadd.s32 1, %s21
    $region7: #{tpu_custom_call.1} parent=1 // loop_footer_branch
      %20 = sbr.rel target = $region3
    $region8: #{tpu_custom_call.1} parent=1 // loop_exit
      _
    %487 = vsyncpa [#allocation3], 1
    %s488 = scalar_lea.sflag [#allocation3], 1
    %489 = vsyncpa %s488, 1
    %490 = vsyncpa [#allocation6], 1
    %s491 = scalar_lea.sflag [#allocation6], 1
    %492 = vsyncpa %s491, 1
    %493 = vsyncpa [#allocation4], 1
    %s494 = scalar_lea.sflag [#allocation4], 1
    %495 = vsyncpa %s494, 1

</llo_original>
